<compile_context>
chip_gen: v7x
topology: tpu7x:2x2x1
jax: 0.10.0
libtpu: 0.0.40
codegen_flags: <defaults>
</compile_context>

<pallas_src>
import functools

import jax
import jax.numpy as jnp
from jax.experimental import pallas as pl
from jax.experimental.pallas import tpu as pltpu


def _round_up(n, m):
    return ((n + m - 1) // m) * m


def _encode_q_kernel(x_ref, we_ref, be_ref, wd_ref, bd_ref, cen_t_ref,
                     cen_nsq_ref, z_ref, xr_ref, q_ref,
                     *, alpha, approx_recip):
    # Matmul operand dtype is whatever the wrapper pre-cast the weights to
    # (bf16 by default, f32 if use_bf16=False).  Accumulation is always f32.
    mm_dtype = we_ref.dtype

    x = x_ref[...]                                            # (TB, D) f32

    # ---- stand-in TAE encoder / decoder (MXU matmuls, f32 accumulation) ----
    z = jnp.tanh(
        jnp.dot(x.astype(mm_dtype), we_ref[...],
                preferred_element_type=jnp.float32)
        + be_ref[...])                                        # (TB, H) f32
    z_ref[...] = z
    xr_ref[...] = (
        jnp.dot(z.astype(mm_dtype), wd_ref[...],
                preferred_element_type=jnp.float32)
        + bd_ref[...])                                        # (TB, D) f32

    # ---- compute_similarity(z, centroids, 'EUC') via Gram-matrix identity ----
    # ||z - c||^2 = ||z||^2 + ||c||^2 - 2 * z.c   (no (B, K, H) intermediate).
    # Cross term kept in f32: O(B*K*H) is tiny vs the encoder, and f32 avoids
    # cancellation error in the identity.
    z_nsq = jnp.sum(z * z, axis=1, keepdims=True)             # (TB, 1)
    cross = jnp.dot(z, cen_t_ref[...],
                    preferred_element_type=jnp.float32)       # (TB, K)
    sim2 = jnp.maximum(z_nsq + cen_nsq_ref[...] - 2.0 * cross, 0.0)
    sim = jnp.sqrt(sim2)                                      # un-squared EUC distance

    # ---- student-t Q, row-normalized (nansum == sum; no NaNs here) ----
    if alpha == 1.0:
        # (1 + sim/1)^(-(1+1)/2) == 1 / (1 + sim): single EUP reciprocal.
        q = pl.reciprocal(1.0 + sim, approx=approx_recip)
    else:
        q = jnp.exp((-(alpha + 1.0) / 2.0) * jnp.log1p(sim / alpha))
    q = q * pl.reciprocal(jnp.sum(q, axis=1, keepdims=True), approx=approx_recip)
    q_ref[...] = q


def _target_dist_kernel(q_ref, colsum_ref, p_ref, *, approx_recip):
    # P = Q^2 / colsum(Q)  (colsum is the GLOBAL batch column sum, passed in),
    # then row-normalized.
    q = q_ref[...]                                            # (TB, K)
    p = (q * q) * pl.reciprocal(colsum_ref[...], approx=approx_recip)
    p = p * pl.reciprocal(jnp.sum(p, axis=1, keepdims=True), approx=approx_recip)
    p_ref[...] = p


def clusternet_forward(x, w_enc, b_enc, w_dec, b_dec, centroids, alpha=1.0,
                       *, block_b=256, use_bf16=True, approx_recip=True):
    """Returns (z, x_reconstr, Q, P) exactly like ClusterNet.forward."""
    B = x.shape[0]
    x_flat = x.reshape(B, -1).astype(jnp.float32)             # (B, C*T)
    D = x_flat.shape[1]
    H = w_enc.shape[1]
    K = centroids.shape[0]

    # Batch tile: multiple of 8 sublanes; pad B up so the tile divides it.
    tb = min(block_b, _round_up(B, 8))
    tb = _round_up(tb, 8)
    B_pad = _round_up(B, tb)
    if B_pad != B:
        x_flat = jnp.pad(x_flat, ((0, B_pad - B), (0, 0)))
    grid = (B_pad // tb,)

    mm_dtype = jnp.bfloat16 if use_bf16 else jnp.float32
    # Pre-cast the (constant-index) weight blocks once: halves their per-tile
    # DMA bytes under bf16 and removes the in-kernel weight casts.
    w_enc_c = w_enc.astype(mm_dtype)                          # (D, H)
    w_dec_c = w_dec.astype(mm_dtype)                          # (H, D)
    b_enc_c = b_enc.reshape(1, H).astype(jnp.float32)
    b_dec_c = b_dec.reshape(1, D).astype(jnp.float32)
    cen = centroids.astype(jnp.float32)
    cen_t = cen.T                                             # (H, K) f32
    cen_nsq = jnp.sum(cen * cen, axis=1, keepdims=True).T     # (1, K)

    params = pltpu.CompilerParams(
        dimension_semantics=("parallel",),     # megacore sharding on v7x
        vmem_limit_bytes=32 * 1024 * 1024,     # safe on v5e/v6e (128M) & v7x (64M)
    )

    # Advisory cost hint for XLA scheduling around the custom call.
    flops = 2 * B_pad * (D * H + H * D + H * K) + 8 * B_pad * (H + K)
    transcendentals = B_pad * H + 2 * B_pad * K               # tanh + recip/exp
    bytes_accessed = 4 * (2 * B_pad * D + B_pad * H + 2 * B_pad * K
                          + 2 * D * H + D + H + H * K + K)
    cost = pl.CostEstimate(flops=flops, transcendentals=transcendentals,
                           bytes_accessed=bytes_accessed)

    def bcast(shape):                 # whole-array block, same for every tile
        return pl.BlockSpec(shape, lambda i: (0, 0))

    def tiled(cols):                  # batch-tiled block
        return pl.BlockSpec((tb, cols), lambda i: (i, 0))

    # ---- pass 1: encoder / decoder / Q (batch-tiled, parallel) ----
    z, xr, q = pl.pallas_call(
        functools.partial(_encode_q_kernel, alpha=float(alpha),
                          approx_recip=approx_recip),
        grid=grid,
        out_shape=(
            jax.ShapeDtypeStruct((B_pad, H), jnp.float32),   # z
            jax.ShapeDtypeStruct((B_pad, D), jnp.float32),   # x_reconstr (flat)
            jax.ShapeDtypeStruct((B_pad, K), jnp.float32),   # Q
        ),
        in_specs=[
            tiled(D),                                    # x
            bcast((D, H)), bcast((1, H)),                # encoder W, b
            bcast((H, D)), bcast((1, D)),                # decoder W, b
            bcast((H, K)), bcast((1, K)),                # centroids^T, ||c||^2
        ],
        out_specs=(tiled(H), tiled(D), tiled(K)),
        compiler_params=params,
        cost_estimate=cost,
    )(x_flat, w_enc_c, b_enc_c, w_dec_c, b_dec_c, cen_t, cen_nsq)

    # ---- global column-sum of Q: couples ALL batch tiles, so it lives once
    #      outside the tiled kernels (matches torch.sum(Q, dim=0) exactly).
    #      Padded rows are excluded so P is unaffected by padding. ----
    q_colsum = jnp.sum(q[:B], axis=0, keepdims=True)          # (1, K)

    # ---- pass 2: target distribution P (batch-tiled, parallel) ----
    p = pl.pallas_call(
        functools.partial(_target_dist_kernel, approx_recip=approx_recip),
        grid=grid,
        out_shape=jax.ShapeDtypeStruct((B_pad, K), jnp.float32),
        in_specs=[tiled(K), bcast((1, K))],
        out_specs=tiled(K),
        compiler_params=params,
    )(q, q_colsum)

    return z[:B], xr[:B].reshape(x.shape), q[:B], p[:B]


if __name__ == "__main__":
    # Small shapes consistent with the module:
    #   batch B=64, channels C=1, time T=16, hidden/centroid size H=32, K=4.
    B, C, T = 64, 1, 16
    H, K = 32, 4
    ALPHA = 1.0

    key = jax.random.PRNGKey(0)
    kx, kwe, kbe, kwd, kbd, kc = jax.random.split(key, 6)

    x = jax.random.normal(kx, (B, C, T), dtype=jnp.float32)

    # Deterministic parameter init (shapes per module __init__ / stand-in TAE).
    w_enc = 0.1 * jax.random.normal(kwe, (C * T, H), dtype=jnp.float32)
    b_enc = 0.1 * jax.random.normal(kbe, (1, H), dtype=jnp.float32)
    w_dec = 0.1 * jax.random.normal(kwd, (H, C * T), dtype=jnp.float32)
    b_dec = 0.1 * jax.random.normal(kbd, (1, C * T), dtype=jnp.float32)
    # centroids: nn.Parameter of shape (n_clusters, centr_size); initialized
    # deterministically (non-zero, as if init_centroids had been called).
    centroids = jax.random.normal(kc, (K, H), dtype=jnp.float32)

    z, x_rec, Q, P = clusternet_forward(
        x, w_enc, b_enc, w_dec, b_dec, centroids, alpha=ALPHA, block_b=32)
    jax.block_until_ready((z, x_rec, Q, P))

    assert z.shape == (B, H)
    assert x_rec.shape == (B, C, T)
    assert Q.shape == (B, K) and P.shape == (B, K)
    # Sanity: Q and P rows are normalized distributions over the K clusters.
    assert bool(jnp.all(jnp.abs(jnp.sum(Q, axis=1) - 1.0) < 1e-2))
    assert bool(jnp.all(jnp.abs(jnp.sum(P, axis=1) - 1.0) < 1e-2))
    print("KERNEL_OK")
</pallas_src>

<mosaic_0001>
module attributes {stable_mosaic.version = 11 : i64} {
  func.func @_encode_q_kernel(%arg0: i32, %arg1: memref<32x16xf32, #tpu.memory_space<vmem>>, %arg2: memref<16x32xbf16, #tpu.memory_space<vmem>>, %arg3: memref<1x32xf32, #tpu.memory_space<vmem>>, %arg4: memref<32x16xbf16, #tpu.memory_space<vmem>>, %arg5: memref<1x16xf32, #tpu.memory_space<vmem>>, %arg6: memref<32x4xf32, #tpu.memory_space<vmem>>, %arg7: memref<1x4xf32, #tpu.memory_space<vmem>>, %arg8: memref<32x32xf32, #tpu.memory_space<vmem>>, %arg9: memref<32x16xf32, #tpu.memory_space<vmem>>, %arg10: memref<32x4xf32, #tpu.memory_space<vmem>>) attributes {dimension_semantics = [#tpu.dimension_semantics<parallel>], iteration_bounds = array<i64: 2>, scalar_prefetch = 0 : i64, scratch_operands = 0 : i64, tpu.core_type = #tpu.core_type<tc>, window_params = [{transform_indices = @transform_0, window_bounds = array<i64: 32, 16>}, {pipeline_mode = #tpu.pipeline_mode<synchronous>, transform_indices = @transform_1, window_bounds = array<i64: 16, 32>}, {pipeline_mode = #tpu.pipeline_mode<synchronous>, transform_indices = @transform_2, window_bounds = array<i64: 1, 32>}, {pipeline_mode = #tpu.pipeline_mode<synchronous>, transform_indices = @transform_3, window_bounds = array<i64: 32, 16>}, {pipeline_mode = #tpu.pipeline_mode<synchronous>, transform_indices = @transform_4, window_bounds = array<i64: 1, 16>}, {pipeline_mode = #tpu.pipeline_mode<synchronous>, transform_indices = @transform_5, window_bounds = array<i64: 32, 4>}, {pipeline_mode = #tpu.pipeline_mode<synchronous>, transform_indices = @transform_6, window_bounds = array<i64: 1, 4>}, {transform_indices = @transform_7, window_bounds = array<i64: 32, 32>}, {transform_indices = @transform_8, window_bounds = array<i64: 32, 16>}, {transform_indices = @transform_9, window_bounds = array<i64: 32, 4>}]} {
    %c0 = arith.constant 0 : index
    %c0_0 = arith.constant 0 : index
    %0 = vector.load %arg1[%c0, %c0_0] : memref<32x16xf32, #tpu.memory_space<vmem>>, vector<32x16xf32>
    %1 = arith.truncf %0 : vector<32x16xf32> to vector<32x16xbf16>
    %c0_1 = arith.constant 0 : index
    %c0_2 = arith.constant 0 : index
    %2 = vector.load %arg2[%c0_1, %c0_2] : memref<16x32xbf16, #tpu.memory_space<vmem>>, vector<16x32xbf16>
    %cst = arith.constant dense<0.000000e+00> : vector<32x32xf32>
    %3 = tpu.matmul %1, %2, %cst {dimension_numbers = #tpu.dot_dimension_numbers<[1], [0], [0], [1], [0, 0, 1, 1], [], []>} : vector<32x16xbf16>, vector<16x32xbf16>, vector<32x32xf32> -> vector<32x32xf32>
    %c0_3 = arith.constant 0 : index
    %c0_4 = arith.constant 0 : index
    %4 = vector.load %arg3[%c0_3, %c0_4] : memref<1x32xf32, #tpu.memory_space<vmem>>, vector<1x32xf32>
    %5 = vector.broadcast %4 : vector<1x32xf32> to vector<32x32xf32>
    %6 = arith.addf %3, %5 : vector<32x32xf32>
    %7 = math.tanh %6 : vector<32x32xf32>
    %c0_5 = arith.constant 0 : index
    %c0_6 = arith.constant 0 : index
    %8 = vector.load %arg8[%c0_5, %c0_6] : memref<32x32xf32, #tpu.memory_space<vmem>>, vector<32x32xf32>
    tpu.vector_store %arg8[%c0_5, %c0_6], %7 {strides = array<i32>} : memref<32x32xf32, #tpu.memory_space<vmem>>, vector<32x32xf32>,
    %9 = arith.truncf %7 : vector<32x32xf32> to vector<32x32xbf16>
    %c0_7 = arith.constant 0 : index
    %c0_8 = arith.constant 0 : index
    %10 = vector.load %arg4[%c0_7, %c0_8] : memref<32x16xbf16, #tpu.memory_space<vmem>>, vector<32x16xbf16>
    %cst_9 = arith.constant dense<0.000000e+00> : vector<32x16xf32>
    %11 = tpu.matmul %9, %10, %cst_9 {dimension_numbers = #tpu.dot_dimension_numbers<[1], [0], [0], [1], [0, 0, 1, 1], [], []>} : vector<32x32xbf16>, vector<32x16xbf16>, vector<32x16xf32> -> vector<32x16xf32>
    %c0_10 = arith.constant 0 : index
    %c0_11 = arith.constant 0 : index
    %12 = vector.load %arg5[%c0_10, %c0_11] : memref<1x16xf32, #tpu.memory_space<vmem>>, vector<1x16xf32>
    %13 = vector.broadcast %12 : vector<1x16xf32> to vector<32x16xf32>
    %14 = arith.addf %11, %13 : vector<32x16xf32>
    %c0_12 = arith.constant 0 : index
    %c0_13 = arith.constant 0 : index
    %15 = vector.load %arg9[%c0_12, %c0_13] : memref<32x16xf32, #tpu.memory_space<vmem>>, vector<32x16xf32>
    tpu.vector_store %arg9[%c0_12, %c0_13], %14 {strides = array<i32>} : memref<32x16xf32, #tpu.memory_space<vmem>>, vector<32x16xf32>,
    %16 = arith.mulf %7, %7 : vector<32x32xf32>
    %cst_14 = arith.constant dense<0.000000e+00> : vector<32xf32>
    %17 = vector.multi_reduction <add>, %16, %cst_14 [1] : vector<32x32xf32> to vector<32xf32>
    %18 = vector.shape_cast %17 : vector<32xf32> to vector<32x1xf32>
    %c0_15 = arith.constant 0 : index
    %c0_16 = arith.constant 0 : index
    %19 = vector.load %arg6[%c0_15, %c0_16] : memref<32x4xf32, #tpu.memory_space<vmem>>, vector<32x4xf32>
    %cst_17 = arith.constant dense<0.000000e+00> : vector<32x4xf32>
    %20 = tpu.matmul %7, %19, %cst_17 {dimension_numbers = #tpu.dot_dimension_numbers<[1], [0], [0], [1], [0, 0, 1, 1], [], []>} : vector<32x32xf32>, vector<32x4xf32>, vector<32x4xf32> -> vector<32x4xf32>
    %c0_18 = arith.constant 0 : index
    %c0_19 = arith.constant 0 : index
    %21 = vector.load %arg7[%c0_18, %c0_19] : memref<1x4xf32, #tpu.memory_space<vmem>>, vector<1x4xf32>
    %22 = vector.broadcast %18 : vector<32x1xf32> to vector<32x4xf32>
    %23 = vector.broadcast %21 : vector<1x4xf32> to vector<32x4xf32>
    %24 = arith.addf %22, %23 : vector<32x4xf32>
    %cst_20 = arith.constant 2.000000e+00 : f32
    %25 = vector.broadcast %cst_20 : f32 to vector<32x4xf32>
    %26 = arith.mulf %25, %20 : vector<32x4xf32>
    %27 = arith.subf %24, %26 : vector<32x4xf32>
    %cst_21 = arith.constant 0.000000e+00 : f32
    %28 = vector.broadcast %cst_21 : f32 to vector<32x4xf32>
    %29 = arith.maximumf %27, %28 : vector<32x4xf32>
    %30 = math.sqrt %29 : vector<32x4xf32>
    %cst_22 = arith.constant 1.000000e+00 : f32
    %31 = vector.broadcast %cst_22 : f32 to vector<32x4xf32>
    %32 = arith.addf %31, %30 : vector<32x4xf32>
    %33 = tpu.reciprocal %32 {approx = true} : vector<32x4xf32> -> vector<32x4xf32>
    %cst_23 = arith.constant dense<0.000000e+00> : vector<32xf32>
    %34 = vector.multi_reduction <add>, %33, %cst_23 [1] : vector<32x4xf32> to vector<32xf32>
    %35 = vector.shape_cast %34 : vector<32xf32> to vector<32x1xf32>
    %36 = tpu.reciprocal %35 {approx = true} : vector<32x1xf32> -> vector<32x1xf32>
    %37 = vector.broadcast %36 : vector<32x1xf32> to vector<32x4xf32>
    %38 = arith.mulf %33, %37 : vector<32x4xf32>
    %c0_24 = arith.constant 0 : index
    %c0_25 = arith.constant 0 : index
    %39 = vector.load %arg10[%c0_24, %c0_25] : memref<32x4xf32, #tpu.memory_space<vmem>>, vector<32x4xf32>
    tpu.vector_store %arg10[%c0_24, %c0_25], %38 {strides = array<i32>} : memref<32x4xf32, #tpu.memory_space<vmem>>, vector<32x4xf32>,
    return
  }
  func.func @transform_0(%arg0: i32) -> (i32, i32) {
    %c0_i32 = arith.constant 0 : i32
    %c0_i32_0 = arith.constant 0 : i32
    return %arg0, %c0_i32 : i32, i32
  }
  func.func @transform_1(%arg0: i32) -> (i32, i32) {
    %c0_i32 = arith.constant 0 : i32
    %c0_i32_0 = arith.constant 0 : i32
    %c0_i32_1 = arith.constant 0 : i32
    return %c0_i32, %c0_i32_0 : i32, i32
  }
  func.func @transform_2(%arg0: i32) -> (i32, i32) {
    %c0_i32 = arith.constant 0 : i32
    %c0_i32_0 = arith.constant 0 : i32
    %c0_i32_1 = arith.constant 0 : i32
    return %c0_i32, %c0_i32_0 : i32, i32
  }
  func.func @transform_3(%arg0: i32) -> (i32, i32) {
    %c0_i32 = arith.constant 0 : i32
    %c0_i32_0 = arith.constant 0 : i32
    %c0_i32_1 = arith.constant 0 : i32
    return %c0_i32, %c0_i32_0 : i32, i32
  }
  func.func @transform_4(%arg0: i32) -> (i32, i32) {
    %c0_i32 = arith.constant 0 : i32
    %c0_i32_0 = arith.constant 0 : i32
    %c0_i32_1 = arith.constant 0 : i32
    return %c0_i32, %c0_i32_0 : i32, i32
  }
  func.func @transform_5(%arg0: i32) -> (i32, i32) {
    %c0_i32 = arith.constant 0 : i32
    %c0_i32_0 = arith.constant 0 : i32
    %c0_i32_1 = arith.constant 0 : i32
    return %c0_i32, %c0_i32_0 : i32, i32
  }
  func.func @transform_6(%arg0: i32) -> (i32, i32) {
    %c0_i32 = arith.constant 0 : i32
    %c0_i32_0 = arith.constant 0 : i32
    %c0_i32_1 = arith.constant 0 : i32
    return %c0_i32, %c0_i32_0 : i32, i32
  }
  func.func @transform_7(%arg0: i32) -> (i32, i32) {
    %c0_i32 = arith.constant 0 : i32
    %c0_i32_0 = arith.constant 0 : i32
    return %arg0, %c0_i32 : i32, i32
  }
  func.func @transform_8(%arg0: i32) -> (i32, i32) {
    %c0_i32 = arith.constant 0 : i32
    %c0_i32_0 = arith.constant 0 : i32
    return %arg0, %c0_i32 : i32, i32
  }
  func.func @transform_9(%arg0: i32) -> (i32, i32) {
    %c0_i32 = arith.constant 0 : i32
    %c0_i32_0 = arith.constant 0 : i32
    return %arg0, %c0_i32 : i32, i32
  }
}

</mosaic_0001>

<llo_original>
// kernel: tpu_custom_call.1
$region0: #{tpu_custom_call.1}
  #allocation0 [shape = 'u32[]', space=smem, size = 0x4, offset = 0x4, fixed_abs, tag = 'smem constant byte address 0x4 - core index']
  #allocation1 [shape = 'u32[144,128]{1,0:T(1,128)}', space=vmem, size = 0x12000, scoped, tag = 'internal scratch']
  %s0 = inlined_call_operand.vmem [shape: f32[64,16], index: 0, kind: input, shape index: {}]
  %s1 = inlined_call_operand.vmem [shape: bf16[16,32], index: 1, kind: input, shape index: {}]
  %s2 = inlined_call_operand.vmem [shape: f32[1,32], index: 2, kind: input, shape index: {}]
  %s3 = inlined_call_operand.vmem [shape: bf16[32,16], index: 3, kind: input, shape index: {}]
  %s4 = inlined_call_operand.vmem [shape: f32[1,16], index: 4, kind: input, shape index: {}]
  %s5 = inlined_call_operand.vmem [shape: f32[32,4], index: 5, kind: input, shape index: {}]
  %s6 = inlined_call_operand.vmem [shape: f32[1,4], index: 6, kind: input, shape index: {}]
  %s7 = inlined_call_operand.vmem [shape: f32[64,32], index: 7, kind: output, shape index: {0}]
  %s8 = inlined_call_operand.vmem [shape: f32[64,16], index: 8, kind: output, shape index: {1}]
  %s9 = inlined_call_operand.vmem [shape: f32[64,4], index: 9, kind: output, shape index: {2}]
  %10 = xla_tuple %s7, %s8, %s9
  %s11 = sld [smem:[#allocation0]]
  $region77: #{tpu_custom_call.1} parent=0
    _
  %s13 = ssub.s32 1, %s11
  %s14 = scalar_select 0, %s13, %s11
  loop: start=0, step=1, limit=4
  $region2: #{tpu_custom_call.1} parent=0 // loop_pre_header
    _
  $region3: #{tpu_custom_call.1} parent=0 // loop_header
    %s16 = sphi 0, %s20
    %p17 = scmp.ge.s32.totalorder %s16, 4
    %s26 = sphi 0, %s28
    %s29 = sphi 0, %s26
    %s30 = sphi 0, %s29
    %s46 = sphi 0, %s30
    %s50 = sphi 0, %s50
    %s52 = sphi 0, %s50
    %s53 = sphi 0, %s52
    %s67 = sphi 0, %s53
    %s71 = sphi 0, %s71
    %s73 = sphi 0, %s71
    %s74 = sphi 0, %s73
    %s88 = sphi 0, %s74
    %s92 = sphi 0, %s92
    %s94 = sphi 0, %s92
    %s95 = sphi 0, %s94
    %s109 = sphi 0, %s95
    %s113 = sphi 0, %s113
    %s115 = sphi 0, %s113
    %s116 = sphi 0, %s115
    %s130 = sphi 0, %s116
    %s134 = sphi 0, %s134
    %s136 = sphi 0, %s134
    %s137 = sphi 0, %s136
    %s151 = sphi 0, %s137
    %s155 = sphi 0, %s155
    %s157 = sphi 0, %s155
    %s158 = sphi 0, %s157
    %s172 = sphi 0, %s158
    %s178 = sphi 0, %s180
    %s181 = sphi 0, %s178
    %s182 = sphi 0, %s181
    %s198 = sphi 0, %s182
    %s204 = sphi 0, %s206
    %s207 = sphi 0, %s204
    %s208 = sphi 0, %s207
    %s224 = sphi 0, %s208
    %s230 = sphi 0, %s232
    %s233 = sphi 0, %s230
    %s234 = sphi 0, %s233
    %s250 = sphi 0, %s234
  $region4: #{tpu_custom_call.1} parent=0 // loop_header_branch
    %19 = sbr.rel (%p17) target = $region8
  $region5: #{tpu_custom_call.1} parent=0 // loop_body
    %s21 = ssub.s32 %s16, 1
    %s22 = ssub.s32 %s16, 2
    %s23 = sadd.s32 %s16, 1
    %s24 = ssub.s32 %s16, %s23
    %p25 = scmp.eq.s32.totalorder %s24, 0
    %s27 = sadd.s32 %s26, 1
    %s28 = scalar_select %p25, %s26, %s27
    %p31 = pneg %p25
    %p32 = scmp.eq.s32.totalorder %s16, 1
    %p33 = por %p31, %p32
    %p34 = scmp.ne.s32.totalorder %s26, %s29
    %p35 = scmp.eq.s32.totalorder %s16, 0
    %p36 = por %p34, %p35
    %p37 = scmp.ne.s32.totalorder %s26, %s29
    %p38 = scmp.eq.s32.totalorder %s21, 1
    %p39 = por %p37, %p38
    %p40 = scmp.ne.s32.totalorder %s29, %s30
    %p41 = scmp.eq.s32.totalorder %s21, 0
    %p42 = por %p40, %p41
    %p43 = scmp.ne.s32.totalorder %s29, %s30
    %p44 = scmp.eq.s32.totalorder %s22, 1
    %p45 = por %p43, %p44
    %p47 = scmp.ne.s32.totalorder %s30, %s46
    %p48 = scmp.eq.s32.totalorder %s22, 0
    %p49 = por %p47, %p48
    %s51 = sadd.s32 %s50, 1
    %p54 = scmp.eq.s32.totalorder %s16, 1
    %p55 = scmp.ne.s32.totalorder %s50, %s52
    %p56 = scmp.eq.s32.totalorder %s16, 0
    %p57 = por %p55, %p56
    %p58 = scmp.ne.s32.totalorder %s50, %s52
    %p59 = scmp.eq.s32.totalorder %s21, 1
    %p60 = por %p58, %p59
    %p61 = scmp.ne.s32.totalorder %s52, %s53
    %p62 = scmp.eq.s32.totalorder %s21, 0
    %p63 = por %p61, %p62
    %p64 = scmp.ne.s32.totalorder %s52, %s53
    %p65 = scmp.eq.s32.totalorder %s22, 1
    %p66 = por %p64, %p65
    %p68 = scmp.ne.s32.totalorder %s53, %s67
    %p69 = scmp.eq.s32.totalorder %s22, 0
    %p70 = por %p68, %p69
    %s72 = sadd.s32 %s71, 1
    %p75 = scmp.eq.s32.totalorder %s16, 1
    %p76 = scmp.ne.s32.totalorder %s71, %s73
    %p77 = scmp.eq.s32.totalorder %s16, 0
    %p78 = por %p76, %p77
    %p79 = scmp.ne.s32.totalorder %s71, %s73
    %p80 = scmp.eq.s32.totalorder %s21, 1
    %p81 = por %p79, %p80
    %p82 = scmp.ne.s32.totalorder %s73, %s74
    %p83 = scmp.eq.s32.totalorder %s21, 0
    %p84 = por %p82, %p83
    %p85 = scmp.ne.s32.totalorder %s73, %s74
    %p86 = scmp.eq.s32.totalorder %s22, 1
    %p87 = por %p85, %p86
    %p89 = scmp.ne.s32.totalorder %s74, %s88
    %p90 = scmp.eq.s32.totalorder %s22, 0
    %p91 = por %p89, %p90
    %s93 = sadd.s32 %s92, 1
    %p96 = scmp.eq.s32.totalorder %s16, 1
    %p97 = scmp.ne.s32.totalorder %s92, %s94
    %p98 = scmp.eq.s32.totalorder %s16, 0
    %p99 = por %p97, %p98
    %p100 = scmp.ne.s32.totalorder %s92, %s94
    %p101 = scmp.eq.s32.totalorder %s21, 1
    %p102 = por %p100, %p101
    %p103 = scmp.ne.s32.totalorder %s94, %s95
    %p104 = scmp.eq.s32.totalorder %s21, 0
    %p105 = por %p103, %p104
    %p106 = scmp.ne.s32.totalorder %s94, %s95
    %p107 = scmp.eq.s32.totalorder %s22, 1
    %p108 = por %p106, %p107
    %p110 = scmp.ne.s32.totalorder %s95, %s109
    %p111 = scmp.eq.s32.totalorder %s22, 0
    %p112 = por %p110, %p111
    %s114 = sadd.s32 %s113, 1
    %p117 = scmp.eq.s32.totalorder %s16, 1
    %p118 = scmp.ne.s32.totalorder %s113, %s115
    %p119 = scmp.eq.s32.totalorder %s16, 0
    %p120 = por %p118, %p119
    %p121 = scmp.ne.s32.totalorder %s113, %s115
    %p122 = scmp.eq.s32.totalorder %s21, 1
    %p123 = por %p121, %p122
    %p124 = scmp.ne.s32.totalorder %s115, %s116
    %p125 = scmp.eq.s32.totalorder %s21, 0
    %p126 = por %p124, %p125
    %p127 = scmp.ne.s32.totalorder %s115, %s116
    %p128 = scmp.eq.s32.totalorder %s22, 1
    %p129 = por %p127, %p128
    %p131 = scmp.ne.s32.totalorder %s116, %s130
    %p132 = scmp.eq.s32.totalorder %s22, 0
    %p133 = por %p131, %p132
    %s135 = sadd.s32 %s134, 1
    %p138 = scmp.eq.s32.totalorder %s16, 1
    %p139 = scmp.ne.s32.totalorder %s134, %s136
    %p140 = scmp.eq.s32.totalorder %s16, 0
    %p141 = por %p139, %p140
    %p142 = scmp.ne.s32.totalorder %s134, %s136
    %p143 = scmp.eq.s32.totalorder %s21, 1
    %p144 = por %p142, %p143
    %p145 = scmp.ne.s32.totalorder %s136, %s137
    %p146 = scmp.eq.s32.totalorder %s21, 0
    %p147 = por %p145, %p146
    %p148 = scmp.ne.s32.totalorder %s136, %s137
    %p149 = scmp.eq.s32.totalorder %s22, 1
    %p150 = por %p148, %p149
    %p152 = scmp.ne.s32.totalorder %s137, %s151
    %p153 = scmp.eq.s32.totalorder %s22, 0
    %p154 = por %p152, %p153
    %s156 = sadd.s32 %s155, 1
    %p159 = scmp.eq.s32.totalorder %s16, 1
    %p160 = scmp.ne.s32.totalorder %s155, %s157
    %p161 = scmp.eq.s32.totalorder %s16, 0
    %p162 = por %p160, %p161
    %p163 = scmp.ne.s32.totalorder %s155, %s157
    %p164 = scmp.eq.s32.totalorder %s21, 1
    %p165 = por %p163, %p164
    %p166 = scmp.ne.s32.totalorder %s157, %s158
    %p167 = scmp.eq.s32.totalorder %s21, 0
    %p168 = por %p166, %p167
    %p169 = scmp.ne.s32.totalorder %s157, %s158
    %p170 = scmp.eq.s32.totalorder %s22, 1
    %p171 = por %p169, %p170
    %p173 = scmp.ne.s32.totalorder %s158, %s172
    %p174 = scmp.eq.s32.totalorder %s22, 0
    %p175 = por %p173, %p174
    %s176 = ssub.s32 %s16, %s23
    %p177 = scmp.eq.s32.totalorder %s176, 0
    %s179 = sadd.s32 %s178, 1
    %s180 = scalar_select %p177, %s178, %s179
    %p183 = pneg %p177
    %p184 = scmp.eq.s32.totalorder %s16, 1
    %p185 = por %p183, %p184
    %p186 = scmp.ne.s32.totalorder %s178, %s181
    %p187 = scmp.eq.s32.totalorder %s16, 0
    %p188 = por %p186, %p187
    %p189 = scmp.ne.s32.totalorder %s178, %s181
    %p190 = scmp.eq.s32.totalorder %s21, 1
    %p191 = por %p189, %p190
    %p192 = scmp.ne.s32.totalorder %s181, %s182
    %p193 = scmp.eq.s32.totalorder %s21, 0
    %p194 = por %p192, %p193
    %p195 = scmp.ne.s32.totalorder %s181, %s182
    %p196 = scmp.eq.s32.totalorder %s22, 1
    %p197 = por %p195, %p196
    %p199 = scmp.ne.s32.totalorder %s182, %s198
    %p200 = scmp.eq.s32.totalorder %s22, 0
    %p201 = por %p199, %p200
    %s202 = ssub.s32 %s16, %s23
    %p203 = scmp.eq.s32.totalorder %s202, 0
    %s205 = sadd.s32 %s204, 1
    %s206 = scalar_select %p203, %s204, %s205
    %p209 = pneg %p203
    %p210 = scmp.eq.s32.totalorder %s16, 1
    %p211 = por %p209, %p210
    %p212 = scmp.ne.s32.totalorder %s204, %s207
    %p213 = scmp.eq.s32.totalorder %s16, 0
    %p214 = por %p212, %p213
    %p215 = scmp.ne.s32.totalorder %s204, %s207
    %p216 = scmp.eq.s32.totalorder %s21, 1
    %p217 = por %p215, %p216
    %p218 = scmp.ne.s32.totalorder %s207, %s208
    %p219 = scmp.eq.s32.totalorder %s21, 0
    %p220 = por %p218, %p219
    %p221 = scmp.ne.s32.totalorder %s207, %s208
    %p222 = scmp.eq.s32.totalorder %s22, 1
    %p223 = por %p221, %p222
    %p225 = scmp.ne.s32.totalorder %s208, %s224
    %p226 = scmp.eq.s32.totalorder %s22, 0
    %p227 = por %p225, %p226
    %s228 = ssub.s32 %s16, %s23
    %p229 = scmp.eq.s32.totalorder %s228, 0
    %s231 = sadd.s32 %s230, 1
    %s232 = scalar_select %p229, %s230, %s231
    %p235 = pneg %p229
    %p236 = scmp.eq.s32.totalorder %s16, 1
    %p237 = por %p235, %p236
    %p238 = scmp.ne.s32.totalorder %s230, %s233
    %p239 = scmp.eq.s32.totalorder %s16, 0
    %p240 = por %p238, %p239
    %p241 = scmp.ne.s32.totalorder %s230, %s233
    %p242 = scmp.eq.s32.totalorder %s21, 1
    %p243 = por %p241, %p242
    %p244 = scmp.ne.s32.totalorder %s233, %s234
    %p245 = scmp.eq.s32.totalorder %s21, 0
    %p246 = por %p244, %p245
    %p247 = scmp.ne.s32.totalorder %s233, %s234
    %p248 = scmp.eq.s32.totalorder %s22, 1
    %p249 = por %p247, %p248
    %p251 = scmp.ne.s32.totalorder %s234, %s250
    %p252 = scmp.eq.s32.totalorder %s22, 0
    %p253 = por %p251, %p252
    %p254 = scmp.le.s32.totalorder 1, %s16
    %p255 = scmp.lt.s32.totalorder %s16, 3
    %p256 = pnand %p254, %p255
    %p257 = pneg %p256
    // Predicated region
    $region9: #{tpu_custom_call.1} parent=5 // pred_check
      _
    $region10: #{tpu_custom_call.1} parent=5 // pred_check_branch
      %259 = sbr.rel (%p256) target = $region12
    $region11: #{tpu_custom_call.1} parent=5 // pred_region
      %s260 = ssub.s32 %s16, 1
      // Predicated region
      $region13: #{tpu_custom_call.1} parent=11 // pred_check
        %p261 = pneg %p63
      $region14: #{tpu_custom_call.1} parent=11 // pred_check_branch
        %263 = sbr.rel (%p261) target = $region16
      $region15: #{tpu_custom_call.1} parent=11 // pred_region
        _
      $region16: #{tpu_custom_call.1} parent=11 // pred_fallthru
        _
      // Predicated region
      $region17: #{tpu_custom_call.1} parent=11 // pred_check
        %p264 = pneg %p84
      $region18: #{tpu_custom_call.1} parent=11 // pred_check_branch
        %266 = sbr.rel (%p264) target = $region20
      $region19: #{tpu_custom_call.1} parent=11 // pred_region
        _
      $region20: #{tpu_custom_call.1} parent=11 // pred_fallthru
        _
      // Predicated region
      $region21: #{tpu_custom_call.1} parent=11 // pred_check
        %p267 = pneg %p105
      $region22: #{tpu_custom_call.1} parent=11 // pred_check_branch
        %269 = sbr.rel (%p267) target = $region24
      $region23: #{tpu_custom_call.1} parent=11 // pred_region
        _
      $region24: #{tpu_custom_call.1} parent=11 // pred_fallthru
        _
      // Predicated region
      $region25: #{tpu_custom_call.1} parent=11 // pred_check
        %p270 = pneg %p126
      $region26: #{tpu_custom_call.1} parent=11 // pred_check_branch
        %272 = sbr.rel (%p270) target = $region28
      $region27: #{tpu_custom_call.1} parent=11 // pred_region
        _
      $region28: #{tpu_custom_call.1} parent=11 // pred_fallthru
        _
      // Predicated region
      $region29: #{tpu_custom_call.1} parent=11 // pred_check
        %p273 = pneg %p147
      $region30: #{tpu_custom_call.1} parent=11 // pred_check_branch
        %275 = sbr.rel (%p273) target = $region32
      $region31: #{tpu_custom_call.1} parent=11 // pred_region
        _
      $region32: #{tpu_custom_call.1} parent=11 // pred_fallthru
        _
      // Predicated region
      $region33: #{tpu_custom_call.1} parent=11 // pred_check
        %p276 = pneg %p168
      $region34: #{tpu_custom_call.1} parent=11 // pred_check_branch
        %278 = sbr.rel (%p276) target = $region36
      $region35: #{tpu_custom_call.1} parent=11 // pred_region
        _
      $region36: #{tpu_custom_call.1} parent=11 // pred_fallthru
        _
    $region12: #{tpu_custom_call.1} parent=5 // pred_fallthru
      _
    %p279 = scmp.lt.s32.totalorder %s16, 2
    // Predicated region
    $region37: #{tpu_custom_call.1} parent=5 // pred_check
      %p280 = pneg %p279
    $region38: #{tpu_custom_call.1} parent=5 // pred_check_branch
      %282 = sbr.rel (%p280) target = $region40
    $region39: #{tpu_custom_call.1} parent=5 // pred_region
      // Predicated region
      $region41: #{tpu_custom_call.1} parent=39 // pred_check
        %p283 = pneg %p36
      $region42: #{tpu_custom_call.1} parent=39 // pred_check_branch
        %285 = sbr.rel (%p283) target = $region44
      $region43: #{tpu_custom_call.1} parent=39 // pred_region
        %s286 = smul.u32 4, %s16
        %p287 = scmp.lt.s32.totalorder %s286, 7
        %s288 = scalar_select %p287, %s286, 7
        %s289 = smul.addr %s288, 8
        %s290 = scalar_lea.vmem %s0, %s289
        %s291 = smul.u32 4, %s16
      $region44: #{tpu_custom_call.1} parent=39 // pred_fallthru
        _
    $region40: #{tpu_custom_call.1} parent=5 // pred_fallthru
      _
    %p292 = scmp.le.s32.totalorder 1, %s16
    %p293 = scmp.lt.s32.totalorder %s16, 3
    %p294 = pnand %p292, %p293
    %p295 = pneg %p294
    // Predicated region
    $region45: #{tpu_custom_call.1} parent=5 // pred_check
      _
    $region46: #{tpu_custom_call.1} parent=5 // pred_check_branch
      %297 = sbr.rel (%p294) target = $region48
    $region47: #{tpu_custom_call.1} parent=5 // pred_region
      %s298 = ssub.s32 %s16, 1
      %s299 = smul.u32 4, %s21
      %p300 = scmp.lt.s32.totalorder %s299, 7
      %s301 = scalar_select %p300, %s299, 7
      %s302 = smul.addr %s301, 8
      %s303 = scalar_lea.vmem %s0, %s302
      %p304 = pneg %p42
      %p305 = pneg %p39
      %p306 = pneg %p63
      %p307 = pneg %p60
      %p308 = pneg %p84
      %p309 = pneg %p81
      %p310 = pneg %p105
      %p311 = pneg %p102
      %p312 = pneg %p126
      %p313 = pneg %p123
      %p314 = pneg %p147
      %p315 = pneg %p144
      %p316 = pneg %p168
      %p317 = pneg %p165
      %p318 = pneg %p194
      %p319 = pneg %p191
      %s320 = smul.u32 4, %s21
      %p321 = scmp.lt.s32.totalorder %s320, 7
      %s322 = scalar_select %p321, %s320, 7
      %s323 = smul.addr %s322, 8
      %s324 = scalar_lea.vmem %s7, %s323
      %p325 = pneg %p220
      %p326 = pneg %p217
      %s327 = smul.u32 4, %s21
      %p328 = scmp.lt.s32.totalorder %s327, 7
      %s329 = scalar_select %p328, %s327, 7
      %s330 = smul.addr %s329, 8
      %s331 = scalar_lea.vmem %s8, %s330
      %p332 = pneg %p246
      %p333 = pneg %p243
      %s334 = smul.u32 4, %s21
      %p335 = scmp.lt.s32.totalorder %s334, 7
      %s336 = scalar_select %p335, %s334, 7
      %s337 = smul.addr %s336, 8
      %s338 = scalar_lea.vmem %s9, %s337
      %s339 = smul.u32 4, %s21
      %p340 = scmp.lt.s32.totalorder %s339, 7
      %s341 = scalar_select %p340, %s339, 7
      %s342 = smul.addr %s341, 8
      %s343 = scalar_lea.vmem %s0, %s342
      %s344 = smul.u32 4, %s21
      %s345 = smul.u32 4, %s21
      %p346 = scmp.lt.s32.totalorder %s345, 7
      %s347 = scalar_select %p346, %s345, 7
      %s348 = smul.addr %s347, 8
      %s349 = scalar_lea.vmem %s7, %s348
      %s350 = smul.u32 4, %s21
      %s351 = smul.u32 4, %s21
      %p352 = scmp.lt.s32.totalorder %s351, 7
      %s353 = scalar_select %p352, %s351, 7
      %s354 = smul.addr %s353, 8
      %s355 = scalar_lea.vmem %s8, %s354
      %s356 = smul.u32 4, %s21
      %s357 = smul.u32 4, %s21
      %p358 = scmp.lt.s32.totalorder %s357, 7
      %s359 = scalar_select %p358, %s357, 7
      %s360 = smul.addr %s359, 8
      %s361 = scalar_lea.vmem %s9, %s360
      %s362 = smul.u32 4, %s21
      %v364 = vld [vmem:[%s343] sm:$0xff]
      %v365 = vld [vmem:[%s343 + $0x8] sm:$0xff]
      %v366 = vld [vmem:[%s343 + $0x10] sm:$0xff]
      %v367 = vld [vmem:[%s343 + $0x18] sm:$0xff]
      %v368 = vpack.c.bf16 %v365, %v364
      %v369 = vpack.c.bf16 %v367, %v366
      %v370 = vld [vmem:[%s1] sm:$0xf]
      %v371 = vld [vmem:[%s1 + $0x4] sm:$0xf]
      %v372 = vld [vmem:[%s2] sm:$0x1]
      %v374 = vlaneseq
      %v375 = vshrl.u32 %v374, 7
      %v376 = vsub.s32 0, %v375
      %v377 = vrot.slane %v372, %v376
      %v381 = vunpack.c.l.b16 %v370
      %v382 = vunpack.c.l.b16 %v371
      %v383 = vpack.c.b16 %v382, %v381
      %vm385 = vcmask 130048
      %v387 = vsel %vm385, %v368, 0
      %v390 = vsel %vm385, %v369, 0
      %392 = vmatprep.subr.bf16.mxu0 0
      %393 = vmatpush1.bf16.msra.mxu0 %v383
      %394 = vmatprep.subr.bf16.mxu0 0
      %395 = vmatpush1.bf16.msra.mxu0 0
      %396 = vmatprep.subr.bf16.mxu0 0
      %397 = vmatpush1.bf16.msra.mxu0 0
      %398 = vmatprep.subr.bf16.mxu0 0
      %399 = vmatpush1.bf16.msra.mxu0 0
      %400 = vmatprep.subr.bf16.mxu0 0
      %401 = vmatpush1.bf16.msra.mxu0 0
      %402 = vmatprep.subr.bf16.mxu0 0
      %403 = vmatpush1.bf16.msra.mxu0 0
      %404 = vmatprep.subr.bf16.mxu0 0
      %405 = vmatpush1.bf16.msra.mxu0 0
      %406 = vmatprep.subr.bf16.mxu0 0
      %407 = vmatpush1.bf16.msra.mxu0 0
      %408 = vmatprep.subr.bf16.mxu0 0
      %409 = vmatpush1.bf16.msra.mxu0 0
      %410 = vmatprep.subr.bf16.mxu0 0
      %411 = vmatpush1.bf16.msra.mxu0 0
      %412 = vmatprep.subr.bf16.mxu0 0
      %413 = vmatpush1.bf16.msra.mxu0 0
      %414 = vmatprep.subr.bf16.mxu0 0
      %415 = vmatpush1.bf16.msra.mxu0 0
      %416 = vmatprep.subr.bf16.mxu0 0
      %417 = vmatpush1.bf16.msra.mxu0 0
      %418 = vmatprep.subr.bf16.mxu0 0
      %419 = vmatpush1.bf16.msra.mxu0 0
      %420 = vmatprep.subr.bf16.mxu0 0
      %421 = vmatpush1.bf16.msra.mxu0 0
      %422 = vmatprep.subr.bf16.mxu0 0
      %423 = vmatpush1.bf16.msra.mxu0 0
      %424 = vmatprep.mubr.bf16.mxu0 0
      %425 = vmatmul.mubr.bf16.gmra.mrb[0].mxu0 %v387
      %v426 = vpop.f32.mrb[0].mxu0
      %v427 = vadd.f32 %v377, %v426
      %v428 = vpop.f32.mrb[0].mxu0
      %v429 = vpop.f32.mrb[0].mxu0
      %v430 = vadd.f32 %v377, %v429
      %v431 = vpop.f32.mrb[0].mxu0
      %432 = vmatprep.mubr.bf16.mxu0 0
      %433 = vmatmul.mubr.bf16.gmra.mrb[0].mxu0 %v390
      %v434 = vpop.f32.mrb[0].mxu0
      %v435 = vadd.f32 %v377, %v434
      %v436 = vpop.f32.mrb[0].mxu0
      %v437 = vpop.f32.mrb[0].mxu0
      %v438 = vadd.f32 %v377, %v437
      %v439 = vpop.f32.mrb[0].mxu0
      %440 = vdwg.mxu0
      %v441 = vtanh.pop %v427
      %v442 = vtanh.pop %v430
      %v443 = vtanh.pop %v435
      %v444 = vtanh.pop %v438
      %vm445 = vcmask 261120
      %446 = vst.msk [vmem:[%s349] sm:$0xff] %vm445, %v441
      %447 = vst.msk [vmem:[%s349 + $0x8] sm:$0xff] %vm445, %v442
      %448 = vst.msk [vmem:[%s349 + $0x10] sm:$0xff] %vm445, %v443
      %449 = vst.msk [vmem:[%s349 + $0x18] sm:$0xff] %vm445, %v444
      %v450 = vpack.c.bf16 %v442, %v441
      %v451 = vpack.c.bf16 %v444, %v443
      %v452 = vld [vmem:[%s3] sm:$0xf]
      %v453 = vld [vmem:[%s3 + $0x4] sm:$0xf]
      %v454 = vld [vmem:[%s3 + $0x8] sm:$0xf]
      %v455 = vld [vmem:[%s3 + $0xc] sm:$0xf]
      %v456 = vld [vmem:[%s4] sm:$0x1]
      %v458 = vlaneseq
      %v459 = vshrl.u32 %v458, 7
      %v460 = vsub.s32 0, %v459
      %v461 = vrot.slane %v456, %v460
      %v467 = vunpack.c.l.b16 %v452
      %v468 = vunpack.c.l.b16 %v453
      %v469 = vunpack.c.l.b16 %v454
      %v470 = vunpack.c.l.b16 %v455
      %v471 = vpack.c.b16 %v468, %v467
      %v472 = vpack.c.b16 %v470, %v469
      %v476 = vsel %vm445, %v450, 0
      %v479 = vsel %vm445, %v451, 0
      %481 = vmatprep.subr.bf16.mxu0 0
      %482 = vmatpush1.bf16.msra.mxu0 %v471
      %483 = vmatprep.subr.bf16.mxu0 0
      %484 = vmatpush1.bf16.msra.mxu0 %v472
      %485 = vmatprep.subr.bf16.mxu0 0
      %486 = vmatpush1.bf16.msra.mxu0 0
      %487 = vmatprep.subr.bf16.mxu0 0
      %488 = vmatpush1.bf16.msra.mxu0 0
      %489 = vmatprep.subr.bf16.mxu0 0
      %490 = vmatpush1.bf16.msra.mxu0 0
      %491 = vmatprep.subr.bf16.mxu0 0
      %492 = vmatpush1.bf16.msra.mxu0 0
      %493 = vmatprep.subr.bf16.mxu0 0
      %494 = vmatpush1.bf16.msra.mxu0 0
      %495 = vmatprep.subr.bf16.mxu0 0
      %496 = vmatpush1.bf16.msra.mxu0 0
      %497 = vmatprep.subr.bf16.mxu0 0
      %498 = vmatpush1.bf16.msra.mxu0 0
      %499 = vmatprep.subr.bf16.mxu0 0
      %500 = vmatpush1.bf16.msra.mxu0 0
      %501 = vmatprep.subr.bf16.mxu0 0
      %502 = vmatpush1.bf16.msra.mxu0 0
      %503 = vmatprep.subr.bf16.mxu0 0
      %504 = vmatpush1.bf16.msra.mxu0 0
      %505 = vmatprep.subr.bf16.mxu0 0
      %506 = vmatpush1.bf16.msra.mxu0 0
      %507 = vmatprep.subr.bf16.mxu0 0
      %508 = vmatpush1.bf16.msra.mxu0 0
      %509 = vmatprep.subr.bf16.mxu0 0
      %510 = vmatpush1.bf16.msra.mxu0 0
      %511 = vmatprep.subr.bf16.mxu0 0
      %512 = vmatpush1.bf16.msra.mxu0 0
      %513 = vmatprep.mubr.bf16.mxu0 0
      %514 = vmatmul.mubr.bf16.gmra.mrb[0].mxu0 %v476
      %v515 = vpop.f32.mrb[0].mxu0
      %v516 = vadd.f32 %v461, %v515
      %v517 = vpop.f32.mrb[0].mxu0
      %v518 = vpop.f32.mrb[0].mxu0
      %v519 = vadd.f32 %v461, %v518
      %v520 = vpop.f32.mrb[0].mxu0
      %521 = vmatprep.mubr.bf16.mxu0 0
      %522 = vmatmul.mubr.bf16.gmra.mrb[0].mxu0 %v479
      %v523 = vpop.f32.mrb[0].mxu0
      %v524 = vadd.f32 %v461, %v523
      %v525 = vpop.f32.mrb[0].mxu0
      %v526 = vpop.f32.mrb[0].mxu0
      %v527 = vadd.f32 %v461, %v526
      %v528 = vpop.f32.mrb[0].mxu0
      %529 = vdwg.mxu0
      %530 = vst.msk [vmem:[%s355] sm:$0xff] %vm385, %v516
      %531 = vst.msk [vmem:[%s355 + $0x8] sm:$0xff] %vm385, %v519
      %532 = vst.msk [vmem:[%s355 + $0x10] sm:$0xff] %vm385, %v524
      %533 = vst.msk [vmem:[%s355 + $0x18] sm:$0xff] %vm385, %v527
      %v534 = vmul.f32 %v441, %v441
      %v535 = vmul.f32 %v442, %v442
      %v536 = vmul.f32 %v443, %v443
      %v537 = vmul.f32 %v444, %v444
      %v538 = vsel %vm445, %v534, 0.0
      %539 = vadd.xlane.f32.xlu0 %v538
      %v540 = vpop.xlane.xlu0 %539
      %v541 = vsel %vm445, %v535, 0.0
      %542 = vadd.xlane.f32.xlu0 %v541
      %v543 = vpop.xlane.xlu0 %542
      %v544 = vsel %vm445, %v536, 0.0
      %545 = vadd.xlane.f32.xlu0 %v544
      %v546 = vpop.xlane.xlu0 %545
      %v547 = vsel %vm445, %v537, 0.0
      %548 = vadd.xlane.f32.xlu0 %v547
      %v549 = vpop.xlane.xlu0 %548
      %v550 = vld [vmem:[%s5] sm:$0xff]
      %v551 = vld [vmem:[%s5 + $0x8] sm:$0xff]
      %v552 = vld [vmem:[%s5 + $0x10] sm:$0xff]
      %v553 = vld [vmem:[%s5 + $0x18] sm:$0xff]
      %v555 = vsel %vm445, %v441, 0
      %v558 = vsel %vm445, %v442, 0
      %v561 = vsel %vm445, %v443, 0
      %v564 = vsel %vm445, %v444, 0
      %566 = vmatprep.subr.mxu0 0.0
      %567 = vmatpush1.msra.mxu0 %v550
      %568 = vmatprep.subr.mxu0 0.0
      %569 = vmatpush1.msra.mxu0 %v551
      %570 = vmatprep.subr.mxu0 0.0
      %571 = vmatpush1.msra.mxu0 %v552
      %572 = vmatprep.subr.mxu0 0.0
      %573 = vmatpush1.msra.mxu0 %v553
      %574 = vmatprep.subr.mxu0 0.0
      %575 = vmatpush1.msra.mxu0 0.0
      %576 = vmatprep.subr.mxu0 0.0
      %577 = vmatpush1.msra.mxu0 0.0
      %578 = vmatprep.subr.mxu0 0.0
      %579 = vmatpush1.msra.mxu0 0.0
      %580 = vmatprep.subr.mxu0 0.0
      %581 = vmatpush1.msra.mxu0 0.0
      %582 = vmatprep.subr.mxu0 0.0
      %583 = vmatpush1.msra.mxu0 0.0
      %584 = vmatprep.subr.mxu0 0.0
      %585 = vmatpush1.msra.mxu0 0.0
      %586 = vmatprep.subr.mxu0 0.0
      %587 = vmatpush1.msra.mxu0 0.0
      %588 = vmatprep.subr.mxu0 0.0
      %589 = vmatpush1.msra.mxu0 0.0
      %590 = vmatprep.subr.mxu0 0.0
      %591 = vmatpush1.msra.mxu0 0.0
      %592 = vmatprep.subr.mxu0 0.0
      %593 = vmatpush1.msra.mxu0 0.0
      %594 = vmatprep.subr.mxu0 0.0
      %595 = vmatpush1.msra.mxu0 0.0
      %596 = vmatprep.subr.mxu0 0.0
      %597 = vmatpush1.msra.mxu0 0.0
      %598 = vmatprep.subr.mxu0 0.0
      %599 = vmatpush1.msra.mxu0 0.0
      %600 = vmatprep.subr.mxu0 0.0
      %601 = vmatpush1.msra.mxu0 0.0
      %602 = vmatprep.subr.mxu0 0.0
      %603 = vmatpush1.msra.mxu0 0.0
      %604 = vmatprep.subr.mxu0 0.0
      %605 = vmatpush1.msra.mxu0 0.0
      %606 = vmatprep.subr.mxu0 0.0
      %607 = vmatpush1.msra.mxu0 0.0
      %608 = vmatprep.subr.mxu0 0.0
      %609 = vmatpush1.msra.mxu0 0.0
      %610 = vmatprep.subr.mxu0 0.0
      %611 = vmatpush1.msra.mxu0 0.0
      %612 = vmatprep.subr.mxu0 0.0
      %613 = vmatpush1.msra.mxu0 0.0
      %614 = vmatprep.subr.mxu0 0.0
      %615 = vmatpush1.msra.mxu0 0.0
      %616 = vmatprep.subr.mxu0 0.0
      %617 = vmatpush1.msra.mxu0 0.0
      %618 = vmatprep.subr.mxu0 0.0
      %619 = vmatpush1.msra.mxu0 0.0
      %620 = vmatprep.subr.mxu0 0.0
      %621 = vmatpush1.msra.mxu0 0.0
      %622 = vmatprep.subr.mxu0 0.0
      %623 = vmatpush1.msra.mxu0 0.0
      %624 = vmatprep.subr.mxu0 0.0
      %625 = vmatpush1.msra.mxu0 0.0
      %626 = vmatprep.subr.mxu0 0.0
      %627 = vmatpush1.msra.mxu0 0.0
      %628 = vmatprep.subr.mxu0 0.0
      %629 = vmatpush1.msra.mxu0 0.0
      %630 = vmatprep.mubr.f32.mxu0 0.0
      %631 = vmatmul.mubr.f32.gmra.mrb[0].mxu0 %v555
      %v632 = vpop.f32.mrb[0].mxu0
      %v633 = vadd.f32 0.0, %v632
      %v634 = vpop.f32.mrb[0].mxu0
      %635 = vmatprep.mubr.f32.mxu0 0.0
      %636 = vmatmul.mubr.f32.gmra.mrb[0].mxu0 %v558
      %v637 = vpop.f32.mrb[0].mxu0
      %v638 = vadd.f32 0.0, %v637
      %v639 = vpop.f32.mrb[0].mxu0
      %640 = vmatprep.mubr.f32.mxu0 0.0
      %641 = vmatmul.mubr.f32.gmra.mrb[0].mxu0 %v561
      %v642 = vpop.f32.mrb[0].mxu0
      %v643 = vadd.f32 0.0, %v642
      %v644 = vpop.f32.mrb[0].mxu0
      %645 = vmatprep.mubr.f32.mxu0 0.0
      %646 = vmatmul.mubr.f32.gmra.mrb[0].mxu0 %v564
      %v647 = vpop.f32.mrb[0].mxu0
      %v648 = vadd.f32 0.0, %v647
      %v649 = vpop.f32.mrb[0].mxu0
      %650 = vdwg.mxu0
      %v651 = vld [vmem:[%s6] sm:$0x1]
      %v653 = vlaneseq
      %v654 = vshrl.u32 %v653, 7
      %v655 = vsub.s32 0, %v654
      %v656 = vrot.slane %v651, %v655
      %v658 = vadd.f32 %v540, %v656
      %v659 = vadd.f32 %v543, %v656
      %v660 = vadd.f32 %v546, %v656
      %v661 = vadd.f32 %v549, %v656
      %v662 = vmul.f32 %v633, 2.0
      %v663 = vmul.f32 %v638, 2.0
      %v664 = vmul.f32 %v643, 2.0
      %v665 = vmul.f32 %v648, 2.0
      %v666 = vsub.f32 %v658, %v662
      %v667 = vsub.f32 %v659, %v663
      %v668 = vsub.f32 %v660, %v664
      %v669 = vsub.f32 %v661, %v665
      %v670 = vmax.f32 %v666, 0.0
      %v671 = vmax.f32 %v667, 0.0
      %v672 = vmax.f32 %v668, 0.0
      %v673 = vmax.f32 %v669, 0.0
      %v674 = vrsqrt.pop %v670
      %v675 = vmul.f32 %v670, %v674
      %vm676 = vcmp.eq.f32.partialorder %v670, inf
      %v677 = vsel %vm676, %v670, %v675
      %vm678 = vcmp.eq.f32.partialorder %v670, 0.0
      %v679 = vand.u32 %v670, 2147483648
      %v680 = vsel %vm678, %v679, %v677
      %v681 = vrsqrt.pop %v671
      %v682 = vmul.f32 %v671, %v681
      %vm683 = vcmp.eq.f32.partialorder %v671, inf
      %v684 = vsel %vm683, %v671, %v682
      %vm685 = vcmp.eq.f32.partialorder %v671, 0.0
      %v686 = vand.u32 %v671, 2147483648
      %v687 = vsel %vm685, %v686, %v684
      %v688 = vrsqrt.pop %v672
      %v689 = vmul.f32 %v672, %v688
      %vm690 = vcmp.eq.f32.partialorder %v672, inf
      %v691 = vsel %vm690, %v672, %v689
      %vm692 = vcmp.eq.f32.partialorder %v672, 0.0
      %v693 = vand.u32 %v672, 2147483648
      %v694 = vsel %vm692, %v693, %v691
      %v695 = vrsqrt.pop %v673
      %v696 = vmul.f32 %v673, %v695
      %vm697 = vcmp.eq.f32.partialorder %v673, inf
      %v698 = vsel %vm697, %v673, %v696
      %vm699 = vcmp.eq.f32.partialorder %v673, 0.0
      %v700 = vand.u32 %v673, 2147483648
      %v701 = vsel %vm699, %v700, %v698
      %v702 = vadd.f32 %v680, 1.0
      %v703 = vadd.f32 %v687, 1.0
      %v704 = vadd.f32 %v694, 1.0
      %v705 = vadd.f32 %v701, 1.0
      %v706 = vrcp.pop %v702
      %v707 = vrcp.pop %v703
      %v708 = vrcp.pop %v704
      %v709 = vrcp.pop %v705
      %vm710 = vcmask 31744
      %v711 = vsel %vm710, %v706, 0.0
      %712 = vadd.xlane.f32.xlu0 %v711
      %v713 = vpop.xlane.xlu0 %712
      %v714 = vsel %vm710, %v707, 0.0
      %715 = vadd.xlane.f32.xlu0 %v714
      %v716 = vpop.xlane.xlu0 %715
      %v717 = vsel %vm710, %v708, 0.0
      %718 = vadd.xlane.f32.xlu0 %v717
      %v719 = vpop.xlane.xlu0 %718
      %v720 = vsel %vm710, %v709, 0.0
      %721 = vadd.xlane.f32.xlu0 %v720
      %v722 = vpop.xlane.xlu0 %721
      %v723 = vrcp.pop %v713
      %v724 = vrcp.pop %v716
      %v725 = vrcp.pop %v719
      %v726 = vrcp.pop %v722
      %v727 = vmul.f32 %v706, %v723
      %v728 = vmul.f32 %v707, %v724
      %v729 = vmul.f32 %v708, %v725
      %v730 = vmul.f32 %v709, %v726
      %731 = vst.msk [vmem:[%s361] sm:$0xff] %vm710, %v727
      %732 = vst.msk [vmem:[%s361 + $0x8] sm:$0xff] %vm710, %v728
      %733 = vst.msk [vmem:[%s361 + $0x10] sm:$0xff] %vm710, %v729
      %734 = vst.msk [vmem:[%s361 + $0x18] sm:$0xff] %vm710, %v730
      %s735 = smul.u32 4, %s21
      %p736 = scmp.lt.s32.totalorder %s735, 7
      %s737 = scalar_select %p736, %s735, 7
      %s738 = smul.addr %s737, 8
      %s739 = scalar_lea.vmem %s7, %s738
      %s740 = smul.u32 4, %s21
      %p741 = scmp.lt.s32.totalorder %s740, 7
      %s742 = scalar_select %p741, %s740, 7
      %s743 = smul.addr %s742, 8
      %s744 = scalar_lea.vmem %s8, %s743
      %s745 = smul.u32 4, %s21
      %p746 = scmp.lt.s32.totalorder %s745, 7
      %s747 = scalar_select %p746, %s745, 7
      %s748 = smul.addr %s747, 8
      %s749 = scalar_lea.vmem %s9, %s748
      // Predicated region
      $region49: #{tpu_custom_call.1} parent=47 // pred_check
        %p750 = pneg %p191
      $region50: #{tpu_custom_call.1} parent=47 // pred_check_branch
        %752 = sbr.rel (%p750) target = $region52
      $region51: #{tpu_custom_call.1} parent=47 // pred_region
        %s753 = smul.u32 4, %s21
      $region52: #{tpu_custom_call.1} parent=47 // pred_fallthru
        _
      // Predicated region
      $region53: #{tpu_custom_call.1} parent=47 // pred_check
        %p754 = pneg %p217
      $region54: #{tpu_custom_call.1} parent=47 // pred_check_branch
        %756 = sbr.rel (%p754) target = $region56
      $region55: #{tpu_custom_call.1} parent=47 // pred_region
        %s757 = smul.u32 4, %s21
      $region56: #{tpu_custom_call.1} parent=47 // pred_fallthru
        _
      // Predicated region
      $region57: #{tpu_custom_call.1} parent=47 // pred_check
        %p758 = pneg %p243
      $region58: #{tpu_custom_call.1} parent=47 // pred_check_branch
        %760 = sbr.rel (%p758) target = $region60
      $region59: #{tpu_custom_call.1} parent=47 // pred_region
        %s761 = smul.u32 4, %s21
      $region60: #{tpu_custom_call.1} parent=47 // pred_fallthru
        _
    $region48: #{tpu_custom_call.1} parent=5 // pred_fallthru
      _
    %p762 = scmp.le.s32.totalorder 2, %s16
    // Predicated region
    $region61: #{tpu_custom_call.1} parent=5 // pred_check
      %p763 = pneg %p762
    $region62: #{tpu_custom_call.1} parent=5 // pred_check_branch
      %765 = sbr.rel (%p763) target = $region64
    $region63: #{tpu_custom_call.1} parent=5 // pred_region
      %s766 = ssub.s32 %s16, 2
      // Predicated region
      $region65: #{tpu_custom_call.1} parent=63 // pred_check
        %p767 = pneg %p197
      $region66: #{tpu_custom_call.1} parent=63 // pred_check_branch
        %769 = sbr.rel (%p767) target = $region68
      $region67: #{tpu_custom_call.1} parent=63 // pred_region
        %s770 = smul.u32 4, %s22
        %p771 = scmp.lt.s32.totalorder %s770, 7
        %s772 = scalar_select %p771, %s770, 7
        %s773 = smul.addr %s772, 8
        %s774 = scalar_lea.vmem %s7, %s773
      $region68: #{tpu_custom_call.1} parent=63 // pred_fallthru
        _
      // Predicated region
      $region69: #{tpu_custom_call.1} parent=63 // pred_check
        %p775 = pneg %p223
      $region70: #{tpu_custom_call.1} parent=63 // pred_check_branch
        %777 = sbr.rel (%p775) target = $region72
      $region71: #{tpu_custom_call.1} parent=63 // pred_region
        %s778 = smul.u32 4, %s22
        %p779 = scmp.lt.s32.totalorder %s778, 7
        %s780 = scalar_select %p779, %s778, 7
        %s781 = smul.addr %s780, 8
        %s782 = scalar_lea.vmem %s8, %s781
      $region72: #{tpu_custom_call.1} parent=63 // pred_fallthru
        _
      // Predicated region
      $region73: #{tpu_custom_call.1} parent=63 // pred_check
        %p783 = pneg %p249
      $region74: #{tpu_custom_call.1} parent=63 // pred_check_branch
        %785 = sbr.rel (%p783) target = $region76
      $region75: #{tpu_custom_call.1} parent=63 // pred_region
        %s786 = smul.u32 4, %s22
        %p787 = scmp.lt.s32.totalorder %s786, 7
        %s788 = scalar_select %p787, %s786, 7
        %s789 = smul.addr %s788, 8
        %s790 = scalar_lea.vmem %s9, %s789
      $region76: #{tpu_custom_call.1} parent=63 // pred_fallthru
        _
    $region64: #{tpu_custom_call.1} parent=5 // pred_fallthru
      _
  $region6: #{tpu_custom_call.1} parent=0 // loop_footer
    %s20 = sadd.s32 1, %s16
  $region7: #{tpu_custom_call.1} parent=0 // loop_footer_branch
    %15 = sbr.rel target = $region3
  $region8: #{tpu_custom_call.1} parent=0 // loop_exit
    _

</llo_original>
